<compile_context>
chip_gen: v7x
topology: tpu7x:2x2x1
jax: 0.10.0
libtpu: 0.0.40
codegen_flags: <defaults>
</compile_context>

<pallas_src>
import functools
import math

import jax
import jax.numpy as jnp
import numpy as np
from jax import lax
from jax.experimental import pallas as pl
from jax.experimental.pallas import tpu as pltpu

_LANE = 128
# batched NT contraction: contract last dims, batch on dim 0 -> (Bn, Lq, Lk)
_NT_DIMS = (((2,), (2,)), ((0,), (0,)))


def _attn_kernel_masked(q_ref, k_ref, mask_ref, o_ref, *, scale):
    # q_ref: (Bn, Lq, D), k_ref: (Bn, Lk, D), mask_ref: (Bn, 1, Lk), o_ref: (Bn, Lq, Lk)
    qs = q_ref[...] * scale                               # scale the small (Lq, D) side
    s = lax.dot_general(qs, k_ref[...], dimension_numbers=_NT_DIMS,
                        preferred_element_type=jnp.float32)      # (Bn, Lq, Lk) on MXU
    s = jnp.where(mask_ref[...] > 0, -jnp.inf, s)         # sublane-broadcast over Lq
    s_max = jnp.max(s, axis=-1, keepdims=True)
    e = jnp.exp(s - s_max)
    denom = jnp.sum(e, axis=-1, keepdims=True)            # (Bn, Lq, 1)
    o_ref[...] = (e * pl.reciprocal(denom)).astype(o_ref.dtype)


def _attn_kernel_nomask(q_ref, k_ref, o_ref, *, scale):
    qs = q_ref[...] * scale
    s = lax.dot_general(qs, k_ref[...], dimension_numbers=_NT_DIMS,
                        preferred_element_type=jnp.float32)
    s_max = jnp.max(s, axis=-1, keepdims=True)
    e = jnp.exp(s - s_max)
    denom = jnp.sum(e, axis=-1, keepdims=True)
    o_ref[...] = (e * pl.reciprocal(denom)).astype(o_ref.dtype)


def scaled_dot_attention(q, k, mask, d_k):
    """q: (N, Lq, D) f32, k: (N, Lk, D) f32, mask: (N, Lk) bool or None.

    Returns attn probabilities (N, Lq, Lk) f32, matching PyTorch (fully masked
    rows yield NaN, like masked_fill(-inf) + softmax).
    """
    N, Lq, D = q.shape
    _, Lk, _ = k.shape
    scale = 1.0 / math.sqrt(d_k)

    # ---- lane-dense output: pad Lk up to a multiple of 128 --------------------
    Lk_pad = max(_LANE, ((Lk + _LANE - 1) // _LANE) * _LANE)
    pad = Lk_pad - Lk
    if pad > 0:
        k = jnp.pad(k, ((0, 0), (0, pad), (0, 0)))

    # ---- mask: keep it (N, 1, Lk_pad) f32 (tiny), broadcast over Lq in-kernel --
    if mask is not None:
        m = mask.astype(jnp.float32)                      # (N, Lk), 1.0 = masked
        if pad > 0:
            m = jnp.pad(m, ((0, 0), (0, pad)), constant_values=1.0)
        mask3 = m[:, None, :]                             # (N, 1, Lk_pad)
    elif pad > 0:
        # no user mask, but padded keys must be masked out of the softmax
        row = jnp.concatenate([jnp.zeros((Lk,), jnp.float32),
                               jnp.ones((pad,), jnp.float32)])
        mask3 = jnp.broadcast_to(row, (N, 1, Lk_pad))
    else:
        mask3 = None                                      # true maskless fast path

    # ---- pick how many heads per grid step from a VMEM budget ------------------
    bytes_per_head = 4 * (Lq * D + Lk_pad * D + Lq * Lk_pad + Lk_pad)
    def _step_bytes(bn):
        # double-buffered I/O + f32 score/exp temporaries inside the kernel
        return bn * (2 * bytes_per_head + 2 * 4 * Lq * Lk_pad)
    budget = 28 * 1024 * 1024                             # safe even on v7x (64 MiB VMEM)
    Bn = 1
    for d in range(1, N + 1):
        if N % d == 0 and _step_bytes(d) <= budget:
            Bn = d

    in_specs = [
        pl.BlockSpec((Bn, Lq, D), lambda n: (n, 0, 0)),
        pl.BlockSpec((Bn, Lk_pad, D), lambda n: (n, 0, 0)),
    ]
    args = [q, k]
    if mask3 is not None:
        in_specs.append(pl.BlockSpec((Bn, 1, Lk_pad), lambda n: (n, 0, 0)))
        args.append(mask3)
        kernel = functools.partial(_attn_kernel_masked, scale=scale)
    else:
        kernel = functools.partial(_attn_kernel_nomask, scale=scale)

    cost = pl.CostEstimate(
        flops=2 * N * Lq * Lk_pad * D + 5 * N * Lq * Lk_pad,
        transcendentals=N * Lq * Lk_pad,
        bytes_accessed=4 * (N * Lq * D + N * Lk_pad * D
                            + (N * Lk_pad if mask3 is not None else 0)
                            + N * Lq * Lk_pad),
    )

    out = pl.pallas_call(
        kernel,
        out_shape=jax.ShapeDtypeStruct((N, Lq, Lk_pad), jnp.float32),
        grid_spec=pltpu.PrefetchScalarGridSpec(
            num_scalar_prefetch=0,
            grid=(N // Bn,),
            in_specs=in_specs,
            out_specs=pl.BlockSpec((Bn, Lq, Lk_pad), lambda n: (n, 0, 0)),
        ),
        compiler_params=pltpu.CompilerParams(
            dimension_semantics=("parallel",),   # shards batch across v7x's 2 TCs
            vmem_limit_bytes=48 * 1024 * 1024,
        ),
        cost_estimate=cost,
    )(*args)

    if pad > 0:
        out = out[:, :, :Lk]
    # TODO(synk): for very long Lk, tile Lk with an online (flash-style) softmax
    # instead of a single full-width score tile.
    return out


def _reference(q, k, mask, d_k):
    score = jnp.einsum("nqd,nkd->nqk", q, k) / np.sqrt(d_k)
    if mask is not None:
        score = jnp.where(mask[:, None, :], -jnp.inf, score)
    return jax.nn.softmax(score, axis=-1)


if __name__ == "__main__":
    key = jax.random.PRNGKey(0)
    N, Lq, Lk, D = 2, 8, 8, 32   # d_k = D

    kq, kk, km = jax.random.split(key, 3)
    q = jax.random.normal(kq, (N, Lq, D), dtype=jnp.float32)
    k = jax.random.normal(kk, (N, Lk, D), dtype=jnp.float32)
    # boolean key-padding-style mask (n, k); keep at least one unmasked key per row
    mask = jax.random.bernoulli(km, p=0.25, shape=(N, Lk))
    mask = mask.at[:, 0].set(False)

    attn = jax.block_until_ready(scaled_dot_attention(q, k, mask, d_k=D))
    ref = _reference(q, k, mask, d_k=D)
    np.testing.assert_allclose(np.asarray(attn), np.asarray(ref), atol=1e-5, rtol=1e-5)

    # also exercise the mask=None path
    attn2 = jax.block_until_ready(scaled_dot_attention(q, k, None, d_k=D))
    ref2 = _reference(q, k, None, d_k=D)
    np.testing.assert_allclose(np.asarray(attn2), np.asarray(ref2), atol=1e-5, rtol=1e-5)

    print("KERNEL_OK")
</pallas_src>

<mosaic_0001>
module attributes {stable_mosaic.version = 11 : i64} {
  func.func @_attn_kernel_masked(%arg0: i32, %arg1: memref<2x8x32xf32, #tpu.memory_space<vmem>>, %arg2: memref<2x128x32xf32, #tpu.memory_space<vmem>>, %arg3: memref<2x1x128xf32, #tpu.memory_space<vmem>>, %arg4: memref<2x8x128xf32, #tpu.memory_space<vmem>>) attributes {dimension_semantics = [#tpu.dimension_semantics<parallel>], iteration_bounds = array<i64: 1>, scalar_prefetch = 0 : i64, scratch_operands = 0 : i64, tpu.core_type = #tpu.core_type<tc>, window_params = [{transform_indices = @transform_0, window_bounds = array<i64: 2, 8, 32>}, {transform_indices = @transform_1, window_bounds = array<i64: 2, 128, 32>}, {transform_indices = @transform_2, window_bounds = array<i64: 2, 1, 128>}, {transform_indices = @transform_3, window_bounds = array<i64: 2, 8, 128>}]} {
    %c0 = arith.constant 0 : index
    %c0_0 = arith.constant 0 : index
    %c0_1 = arith.constant 0 : index
    %0 = vector.load %arg1[%c0, %c0_0, %c0_1] : memref<2x8x32xf32, #tpu.memory_space<vmem>>, vector<2x8x32xf32>
    %cst = arith.constant 0.176776692 : f32
    %1 = vector.broadcast %cst : f32 to vector<2x8x32xf32>
    %2 = arith.mulf %0, %1 : vector<2x8x32xf32>
    %c0_2 = arith.constant 0 : index
    %c0_3 = arith.constant 0 : index
    %c0_4 = arith.constant 0 : index
    %3 = vector.load %arg2[%c0_2, %c0_3, %c0_4] : memref<2x128x32xf32, #tpu.memory_space<vmem>>, vector<2x128x32xf32>
    %cst_5 = arith.constant dense<0.000000e+00> : vector<2x8x128xf32>
    %4 = tpu.matmul %2, %3, %cst_5 {dimension_numbers = #tpu.dot_dimension_numbers<[2], [2], [1], [1], [0, 0, 0, 1, 1, 1], [0], [0]>} : vector<2x8x32xf32>, vector<2x128x32xf32>, vector<2x8x128xf32> -> vector<2x8x128xf32>
    %c0_6 = arith.constant 0 : index
    %c0_7 = arith.constant 0 : index
    %c0_8 = arith.constant 0 : index
    %5 = vector.load %arg3[%c0_6, %c0_7, %c0_8] : memref<2x1x128xf32, #tpu.memory_space<vmem>>, vector<2x1x128xf32>
    %cst_9 = arith.constant 0.000000e+00 : f32
    %6 = vector.broadcast %cst_9 : f32 to vector<2x1x128xf32>
    %7 = arith.cmpf ogt, %5, %6 : vector<2x1x128xf32>
    %cst_10 = arith.constant 0xFF800000 : f32
    %8 = vector.shape_cast %7 : vector<2x1x128xi1> to vector<2x1x128xi1>
    %9 = vector.broadcast %8 : vector<2x1x128xi1> to vector<2x8x128xi1>
    %10 = vector.broadcast %cst_10 : f32 to vector<2x8x128xf32>
    %11 = arith.select %9, %10, %4 : vector<2x8x128xi1>, vector<2x8x128xf32>
    %cst_11 = arith.constant dense<0xFF800000> : vector<2x8xf32>
    %12 = vector.multi_reduction <maximumf>, %11, %cst_11 [2] : vector<2x8x128xf32> to vector<2x8xf32>
    %13 = vector.shape_cast %12 : vector<2x8xf32> to vector<2x8x1xf32>
    %14 = vector.broadcast %13 : vector<2x8x1xf32> to vector<2x8x128xf32>
    %15 = arith.subf %11, %14 : vector<2x8x128xf32>
    %16 = math.exp %15 : vector<2x8x128xf32>
    %cst_12 = arith.constant dense<0.000000e+00> : vector<2x8xf32>
    %17 = vector.multi_reduction <add>, %16, %cst_12 [2] : vector<2x8x128xf32> to vector<2x8xf32>
    %18 = vector.shape_cast %17 : vector<2x8xf32> to vector<2x8x1xf32>
    %19 = tpu.reciprocal %18 : vector<2x8x1xf32> -> vector<2x8x1xf32>
    %20 = vector.broadcast %19 : vector<2x8x1xf32> to vector<2x8x128xf32>
    %21 = arith.mulf %16, %20 : vector<2x8x128xf32>
    %c0_13 = arith.constant 0 : index
    %c0_14 = arith.constant 0 : index
    %c0_15 = arith.constant 0 : index
    %22 = vector.load %arg4[%c0_13, %c0_14, %c0_15] : memref<2x8x128xf32, #tpu.memory_space<vmem>>, vector<2x8x128xf32>
    tpu.vector_store %arg4[%c0_13, %c0_14, %c0_15], %21 {strides = array<i32>} : memref<2x8x128xf32, #tpu.memory_space<vmem>>, vector<2x8x128xf32>,
    return
  }
  func.func @transform_0(%arg0: i32) -> (i32, i32, i32) {
    %c0_i32 = arith.constant 0 : i32
    %c0_i32_0 = arith.constant 0 : i32
    %c0_i32_1 = arith.constant 0 : i32
    return %arg0, %c0_i32, %c0_i32_0 : i32, i32, i32
  }
  func.func @transform_1(%arg0: i32) -> (i32, i32, i32) {
    %c0_i32 = arith.constant 0 : i32
    %c0_i32_0 = arith.constant 0 : i32
    %c0_i32_1 = arith.constant 0 : i32
    return %arg0, %c0_i32, %c0_i32_0 : i32, i32, i32
  }
  func.func @transform_2(%arg0: i32) -> (i32, i32, i32) {
    %c0_i32 = arith.constant 0 : i32
    %c0_i32_0 = arith.constant 0 : i32
    %c0_i32_1 = arith.constant 0 : i32
    return %arg0, %c0_i32, %c0_i32_0 : i32, i32, i32
  }
  func.func @transform_3(%arg0: i32) -> (i32, i32, i32) {
    %c0_i32 = arith.constant 0 : i32
    %c0_i32_0 = arith.constant 0 : i32
    %c0_i32_1 = arith.constant 0 : i32
    return %arg0, %c0_i32, %c0_i32_0 : i32, i32, i32
  }
}

</mosaic_0001>

<llo_original>
// kernel: tpu_custom_call.1
$region0: #{tpu_custom_call.1}
  #allocation0 [shape = 'u32[]', space=smem, size = 0x4, offset = 0x4, fixed_abs, tag = 'smem constant byte address 0x4 - core index']
  #allocation1 [shape = 'u32[144,128]{1,0:T(1,128)}', space=vmem, size = 0x12000, scoped, tag = 'internal scratch']
  %s0 = inlined_call_operand.vmem [shape: f32[2,8,32], index: 0, kind: input, shape index: {}]
  %s1 = inlined_call_operand.vmem [shape: f32[2,128,32], index: 1, kind: input, shape index: {}]
  %s2 = inlined_call_operand.vmem [shape: f32[2,1,128], index: 2, kind: input, shape index: {}]
  %s3 = inlined_call_operand.hbm [shape: f32[2,8,128], index: 3, kind: output, shape index: {}]
  %s4 = sld [smem:[#allocation0]]
  $region22: #{tpu_custom_call.1} parent=0
    _
  %s6 = ssub.s32 1, %s4
  %s7 = scalar_select 0, %s6, %s4
  $region1: #{tpu_custom_call.1} parent=0
    #allocation2 [shape = 'u8[8192]{0}', space=vmem, size = 0x2000, scoped, tag = 'output window, operand 0, single buffered']
    #allocation3 [shape = 's32[1]{0}', space=sflag, size = 0x4, scoped, tag = 'scoped memory for tpu_custom_call.1']
    %8 = vsyncpa [#allocation3], 0
    // Predicated region
    $region2: #{tpu_custom_call.1} parent=1 // pred_check
      _
    $region3: #{tpu_custom_call.1} parent=1 // pred_check_branch
      %10 = sbr.rel (0) target = $region5
    $region4: #{tpu_custom_call.1} parent=1 // pred_region
      _
    $region5: #{tpu_custom_call.1} parent=1 // pred_fallthru
      _
    // Predicated region
    $region6: #{tpu_custom_call.1} parent=1 // pred_check
      _
    $region7: #{tpu_custom_call.1} parent=1 // pred_check_branch
      %12 = sbr.rel (0) target = $region9
    $region8: #{tpu_custom_call.1} parent=1 // pred_region
      _
    $region9: #{tpu_custom_call.1} parent=1 // pred_fallthru
      _
    // Predicated region
    $region10: #{tpu_custom_call.1} parent=1 // pred_check
      _
    $region11: #{tpu_custom_call.1} parent=1 // pred_check_branch
      %14 = sbr.rel (0) target = $region13
    $region12: #{tpu_custom_call.1} parent=1 // pred_region
      _
    $region13: #{tpu_custom_call.1} parent=1 // pred_fallthru
      _
    %v15 = vld [vmem:[%s0] sm:$0xff]
    %v16 = vld [vmem:[%s0 + $0x8] sm:$0xff]
    %v17 = vmul.f32 %v15, 0.17677669
    %v18 = vmul.f32 %v16, 0.17677669
    %v19 = vld [vmem:[%s1] sm:$0xff]
    %v20 = vld [vmem:[%s1 + $0x8] sm:$0xff]
    %v21 = vld [vmem:[%s1 + $0x10] sm:$0xff]
    %v22 = vld [vmem:[%s1 + $0x18] sm:$0xff]
    %v23 = vld [vmem:[%s1 + $0x20] sm:$0xff]
    %v24 = vld [vmem:[%s1 + $0x28] sm:$0xff]
    %v25 = vld [vmem:[%s1 + $0x30] sm:$0xff]
    %v26 = vld [vmem:[%s1 + $0x38] sm:$0xff]
    %v27 = vld [vmem:[%s1 + $0x40] sm:$0xff]
    %v28 = vld [vmem:[%s1 + $0x48] sm:$0xff]
    %v29 = vld [vmem:[%s1 + $0x50] sm:$0xff]
    %v30 = vld [vmem:[%s1 + $0x58] sm:$0xff]
    %v31 = vld [vmem:[%s1 + $0x60] sm:$0xff]
    %v32 = vld [vmem:[%s1 + $0x68] sm:$0xff]
    %v33 = vld [vmem:[%s1 + $0x70] sm:$0xff]
    %v34 = vld [vmem:[%s1 + $0x78] sm:$0xff]
    %v35 = vld [vmem:[%s1 + $0x80] sm:$0xff]
    %v36 = vld [vmem:[%s1 + $0x88] sm:$0xff]
    %v37 = vld [vmem:[%s1 + $0x90] sm:$0xff]
    %v38 = vld [vmem:[%s1 + $0x98] sm:$0xff]
    %v39 = vld [vmem:[%s1 + $0xa0] sm:$0xff]
    %v40 = vld [vmem:[%s1 + $0xa8] sm:$0xff]
    %v41 = vld [vmem:[%s1 + $0xb0] sm:$0xff]
    %v42 = vld [vmem:[%s1 + $0xb8] sm:$0xff]
    %v43 = vld [vmem:[%s1 + $0xc0] sm:$0xff]
    %v44 = vld [vmem:[%s1 + $0xc8] sm:$0xff]
    %v45 = vld [vmem:[%s1 + $0xd0] sm:$0xff]
    %v46 = vld [vmem:[%s1 + $0xd8] sm:$0xff]
    %v47 = vld [vmem:[%s1 + $0xe0] sm:$0xff]
    %v48 = vld [vmem:[%s1 + $0xe8] sm:$0xff]
    %v49 = vld [vmem:[%s1 + $0xf0] sm:$0xff]
    %v50 = vld [vmem:[%s1 + $0xf8] sm:$0xff]
    %vm51 = vcmask 261120
    %v53 = vsel %vm51, %v17, 0
    %v56 = vsel %vm51, %v19, 0
    %v59 = vsel %vm51, %v20, 0
    %v62 = vsel %vm51, %v21, 0
    %v65 = vsel %vm51, %v22, 0
    %v68 = vsel %vm51, %v23, 0
    %v71 = vsel %vm51, %v24, 0
    %v74 = vsel %vm51, %v25, 0
    %v77 = vsel %vm51, %v26, 0
    %v80 = vsel %vm51, %v27, 0
    %v83 = vsel %vm51, %v28, 0
    %v86 = vsel %vm51, %v29, 0
    %v89 = vsel %vm51, %v30, 0
    %v92 = vsel %vm51, %v31, 0
    %v95 = vsel %vm51, %v32, 0
    %v98 = vsel %vm51, %v33, 0
    %v101 = vsel %vm51, %v34, 0
    %103 = vmatprep.subr.mxu0 0.0
    %104 = vmatpush1.xpose.msra.mxu0 %v56
    %105 = vmatprep.subr.mxu0 0.0
    %106 = vmatpush1.xpose.msra.mxu0 %v59
    %107 = vmatprep.subr.mxu0 0.0
    %108 = vmatpush1.xpose.msra.mxu0 %v62
    %109 = vmatprep.subr.mxu0 0.0
    %110 = vmatpush1.xpose.msra.mxu0 %v65
    %111 = vmatprep.subr.mxu0 0.0
    %112 = vmatpush1.xpose.msra.mxu0 %v68
    %113 = vmatprep.subr.mxu0 0.0
    %114 = vmatpush1.xpose.msra.mxu0 %v71
    %115 = vmatprep.subr.mxu0 0.0
    %116 = vmatpush1.xpose.msra.mxu0 %v74
    %117 = vmatprep.subr.mxu0 0.0
    %118 = vmatpush1.xpose.msra.mxu0 %v77
    %119 = vmatprep.subr.mxu0 0.0
    %120 = vmatpush1.xpose.msra.mxu0 %v80
    %121 = vmatprep.subr.mxu0 0.0
    %122 = vmatpush1.xpose.msra.mxu0 %v83
    %123 = vmatprep.subr.mxu0 0.0
    %124 = vmatpush1.xpose.msra.mxu0 %v86
    %125 = vmatprep.subr.mxu0 0.0
    %126 = vmatpush1.xpose.msra.mxu0 %v89
    %127 = vmatprep.subr.mxu0 0.0
    %128 = vmatpush1.xpose.msra.mxu0 %v92
    %129 = vmatprep.subr.mxu0 0.0
    %130 = vmatpush1.xpose.msra.mxu0 %v95
    %131 = vmatprep.subr.mxu0 0.0
    %132 = vmatpush1.xpose.msra.mxu0 %v98
    %133 = vmatprep.subr.mxu0 0.0
    %134 = vmatpush1.xpose.msra.mxu0 %v101
    %135 = vmatprep.subr.mxu0 0.0
    %136 = vmatpush1.xpose.msra.mxu0 0.0
    %137 = vmatprep.subr.mxu0 0.0
    %138 = vmatpush1.xpose.msra.mxu0 0.0
    %139 = vmatprep.subr.mxu0 0.0
    %140 = vmatpush1.xpose.msra.mxu0 0.0
    %141 = vmatprep.subr.mxu0 0.0
    %142 = vmatpush1.xpose.msra.mxu0 0.0
    %143 = vmatprep.subr.mxu0 0.0
    %144 = vmatpush1.xpose.msra.mxu0 0.0
    %145 = vmatprep.subr.mxu0 0.0
    %146 = vmatpush1.xpose.msra.mxu0 0.0
    %147 = vmatprep.subr.mxu0 0.0
    %148 = vmatpush1.xpose.msra.mxu0 0.0
    %149 = vmatprep.subr.mxu0 0.0
    %150 = vmatpush1.xpose.msra.mxu0 0.0
    %151 = vmatprep.subr.mxu0 0.0
    %152 = vmatpush1.xpose.msra.mxu0 0.0
    %153 = vmatprep.subr.mxu0 0.0
    %154 = vmatpush1.xpose.msra.mxu0 0.0
    %155 = vmatprep.subr.mxu0 0.0
    %156 = vmatpush1.xpose.msra.mxu0 0.0
    %157 = vmatprep.subr.mxu0 0.0
    %158 = vmatpush1.xpose.msra.mxu0 0.0
    %159 = vmatprep.subr.mxu0 0.0
    %160 = vmatpush1.xpose.msra.mxu0 0.0
    %161 = vmatprep.subr.mxu0 0.0
    %162 = vmatpush1.xpose.msra.mxu0 0.0
    %163 = vmatprep.subr.mxu0 0.0
    %164 = vmatpush1.xpose.msra.mxu0 0.0
    %165 = vmatprep.subr.mxu0 0.0
    %166 = vmatpush1.xpose.msra.mxu0 0.0
    %167 = vmatprep.mubr.f32.mxu0 0.0
    %168 = vmatmul.mubr.f32.gmra.mrb[0].mxu0 %v53
    %v169 = vpop.f32.mrb[0].mxu0
    %v170 = vadd.f32 0.0, %v169
    %v171 = vpop.f32.mrb[0].mxu0
    %172 = vdwg.mxu0
    %v174 = vsel %vm51, %v18, 0
    %v177 = vsel %vm51, %v35, 0
    %v180 = vsel %vm51, %v36, 0
    %v183 = vsel %vm51, %v37, 0
    %v186 = vsel %vm51, %v38, 0
    %v189 = vsel %vm51, %v39, 0
    %v192 = vsel %vm51, %v40, 0
    %v195 = vsel %vm51, %v41, 0
    %v198 = vsel %vm51, %v42, 0
    %v201 = vsel %vm51, %v43, 0
    %v204 = vsel %vm51, %v44, 0
    %v207 = vsel %vm51, %v45, 0
    %v210 = vsel %vm51, %v46, 0
    %v213 = vsel %vm51, %v47, 0
    %v216 = vsel %vm51, %v48, 0
    %v219 = vsel %vm51, %v49, 0
    %v222 = vsel %vm51, %v50, 0
    %224 = vmatprep.subr.mxu0 0.0
    %225 = vmatpush1.xpose.msra.mxu0 %v177
    %226 = vmatprep.subr.mxu0 0.0
    %227 = vmatpush1.xpose.msra.mxu0 %v180
    %228 = vmatprep.subr.mxu0 0.0
    %229 = vmatpush1.xpose.msra.mxu0 %v183
    %230 = vmatprep.subr.mxu0 0.0
    %231 = vmatpush1.xpose.msra.mxu0 %v186
    %232 = vmatprep.subr.mxu0 0.0
    %233 = vmatpush1.xpose.msra.mxu0 %v189
    %234 = vmatprep.subr.mxu0 0.0
    %235 = vmatpush1.xpose.msra.mxu0 %v192
    %236 = vmatprep.subr.mxu0 0.0
    %237 = vmatpush1.xpose.msra.mxu0 %v195
    %238 = vmatprep.subr.mxu0 0.0
    %239 = vmatpush1.xpose.msra.mxu0 %v198
    %240 = vmatprep.subr.mxu0 0.0
    %241 = vmatpush1.xpose.msra.mxu0 %v201
    %242 = vmatprep.subr.mxu0 0.0
    %243 = vmatpush1.xpose.msra.mxu0 %v204
    %244 = vmatprep.subr.mxu0 0.0
    %245 = vmatpush1.xpose.msra.mxu0 %v207
    %246 = vmatprep.subr.mxu0 0.0
    %247 = vmatpush1.xpose.msra.mxu0 %v210
    %248 = vmatprep.subr.mxu0 0.0
    %249 = vmatpush1.xpose.msra.mxu0 %v213
    %250 = vmatprep.subr.mxu0 0.0
    %251 = vmatpush1.xpose.msra.mxu0 %v216
    %252 = vmatprep.subr.mxu0 0.0
    %253 = vmatpush1.xpose.msra.mxu0 %v219
    %254 = vmatprep.subr.mxu0 0.0
    %255 = vmatpush1.xpose.msra.mxu0 %v222
    %256 = vmatprep.subr.mxu0 0.0
    %257 = vmatpush1.xpose.msra.mxu0 0.0
    %258 = vmatprep.subr.mxu0 0.0
    %259 = vmatpush1.xpose.msra.mxu0 0.0
    %260 = vmatprep.subr.mxu0 0.0
    %261 = vmatpush1.xpose.msra.mxu0 0.0
    %262 = vmatprep.subr.mxu0 0.0
    %263 = vmatpush1.xpose.msra.mxu0 0.0
    %264 = vmatprep.subr.mxu0 0.0
    %265 = vmatpush1.xpose.msra.mxu0 0.0
    %266 = vmatprep.subr.mxu0 0.0
    %267 = vmatpush1.xpose.msra.mxu0 0.0
    %268 = vmatprep.subr.mxu0 0.0
    %269 = vmatpush1.xpose.msra.mxu0 0.0
    %270 = vmatprep.subr.mxu0 0.0
    %271 = vmatpush1.xpose.msra.mxu0 0.0
    %272 = vmatprep.subr.mxu0 0.0
    %273 = vmatpush1.xpose.msra.mxu0 0.0
    %274 = vmatprep.subr.mxu0 0.0
    %275 = vmatpush1.xpose.msra.mxu0 0.0
    %276 = vmatprep.subr.mxu0 0.0
    %277 = vmatpush1.xpose.msra.mxu0 0.0
    %278 = vmatprep.subr.mxu0 0.0
    %279 = vmatpush1.xpose.msra.mxu0 0.0
    %280 = vmatprep.subr.mxu0 0.0
    %281 = vmatpush1.xpose.msra.mxu0 0.0
    %282 = vmatprep.subr.mxu0 0.0
    %283 = vmatpush1.xpose.msra.mxu0 0.0
    %284 = vmatprep.subr.mxu0 0.0
    %285 = vmatpush1.xpose.msra.mxu0 0.0
    %286 = vmatprep.subr.mxu0 0.0
    %287 = vmatpush1.xpose.msra.mxu0 0.0
    %288 = vmatprep.mubr.f32.mxu0 0.0
    %289 = vmatmul.mubr.f32.gmra.mrb[0].mxu0 %v174
    %v290 = vpop.f32.mrb[0].mxu0
    %v291 = vadd.f32 0.0, %v290
    %v292 = vpop.f32.mrb[0].mxu0
    %293 = vdwg.mxu0
    %v294 = vld [vmem:[%s2] sm:$0x1]
    %v295 = vld [vmem:[%s2 + $0x1] sm:$0x1]
    %vm296 = vcmp.gt.f32.partialorder %v294, 0.0
    %vm297 = vcmp.gt.f32.partialorder %v295, 0.0
    %v298 = vsel %vm296, 1, 0
    %v299 = vsel %vm297, 1, 0
    %v300 = vlaneseq
    %v301 = vshrl.u32 %v300, 7
    %v302 = vsub.s32 0, %v301
    %v303 = vrot.slane %v298, %v302
    %v304 = vlaneseq
    %v305 = vshrl.u32 %v304, 7
    %v306 = vsub.s32 0, %v305
    %v307 = vrot.slane %v299, %v306
    %vm308 = vcmp.eq.s32.totalorder %v303, 1
    %vm309 = vcmp.eq.s32.totalorder %v307, 1
    %v310 = vsel %vm308, -inf, %v170
    %v311 = vsel %vm309, -inf, %v291
    %312 = vmax.xlane.f32.xlu0 %v310
    %v313 = vpop.xlane.xlu0 %312
    %314 = vmax.xlane.f32.xlu0 %v311
    %v315 = vpop.xlane.xlu0 %314
    %v316 = vsub.f32 %v310, %v313
    %v317 = vsub.f32 %v311, %v315
    %v318 = vmul.f32 %v316, 1.442695
    %v319 = vpow.pop %v318
    %v320 = vmul.f32 %v317, 1.442695
    %v321 = vpow.pop %v320
    %322 = vadd.xlane.f32.xlu0 %v319
    %v323 = vpop.xlane.xlu0 %322
    %324 = vadd.xlane.f32.xlu0 %v321
    %v325 = vpop.xlane.xlu0 %324
    %v326 = vrcp.pop %v323
    %v327 = vrcp.pop %v325
    %v328 = vmul.f32 %v319, %v326
    %v329 = vmul.f32 %v321, %v327
    %330 = vst [vmem:[#allocation2] sm:$0xff] %v328
    %331 = vst [vmem:[#allocation2 + $0x8] sm:$0xff] %v329
    // Predicated region
    $region14: #{tpu_custom_call.1} parent=1 // pred_check
      _
    $region15: #{tpu_custom_call.1} parent=1 // pred_check_branch
      %333 = sbr.rel (0) target = $region17
    $region16: #{tpu_custom_call.1} parent=1 // pred_region
      %s335 = ssub.s32 256, 256
      %336 = vsyncadd [#allocation3], %s335
      %s337 = sshll.u32 [#allocation2], 4
      %s338 = int_to_ptr.vmem [resolvable:$true] %s337
      %343 = dma.vmem_to_hbm [thread:$0]  %s338, 256, %s3, [#allocation3], 128, 128, 8
    $region17: #{tpu_custom_call.1} parent=1 // pred_fallthru
      _
    // Predicated region
    $region18: #{tpu_custom_call.1} parent=1 // pred_check
      _
    $region19: #{tpu_custom_call.1} parent=1 // pred_check_branch
      %345 = sbr.rel (0) target = $region21
    $region20: #{tpu_custom_call.1} parent=1 // pred_region
      %346 = dma.done [#allocation3], 256
    $region21: #{tpu_custom_call.1} parent=1 // pred_fallthru
      _
    %347 = vsyncpa [#allocation3], 1

</llo_original>
